<compile_context>
chip_gen: v7x
topology: tpu7x:2x2x1
jax: 0.10.0
libtpu: 0.0.40
codegen_flags: <defaults>
</compile_context>

<pallas_src>
import jax
import jax.numpy as jnp
from jax.experimental import pallas as pl
from jax.experimental.pallas import tpu as pltpu


def _round_up(x, m):
    return (x + m - 1) // m * m


def _vmem_limit_bytes():
    """Scoped-VMEM budget: half of physical capacity, clamped to [32, 64] MiB."""
    try:
        cap = pltpu.get_tpu_info().vmem_capacity_bytes
        return int(min(64 * 1024 * 1024, max(32 * 1024 * 1024, cap // 2)))
    except Exception:
        return 32 * 1024 * 1024


def patch_embed_kernel(x_ref, w_ref, b_ref, o_ref):
    # x_ref: (TILE_M, Kp)  patch rows for this tile (compute_dtype)
    # w_ref: (Kp, Ep)      transposed conv weight, resident in VMEM (compute_dtype)
    # b_ref: (1, Ep)       conv bias (f32)
    # o_ref: (TILE_M, Ep)  output tokens (out_dtype)
    acc = jnp.dot(x_ref[...], w_ref[...], preferred_element_type=jnp.float32)
    o_ref[...] = (acc + b_ref[...]).astype(o_ref.dtype)


def dev_token_learner(x, weight, bias, patch_size, *, tile_m=512,
                      compute_dtype=jnp.bfloat16, out_dtype=None):
    """x: (B, C, H, W) NCHW; weight: (E, C, p, p); bias: (E,) -> (B, N, E).

    compute_dtype: dtype of the streamed matmul operands (default bf16; the
    kernel is HBM-bound and bf16 is MXU-native on v5e/v6e/v7x). Accumulation
    and the bias add are always f32. out_dtype defaults to x.dtype.
    """
    B, C, H, W = x.shape
    p = patch_size
    Hp, Wp = H // p, W // p
    N = Hp * Wp
    E = weight.shape[0]
    K = C * p * p
    M = B * N

    if compute_dtype is None:
        compute_dtype = x.dtype
    if out_dtype is None:
        out_dtype = x.dtype

    # --- padded / tiled sizes -------------------------------------------------
    # K: only pad when K > 128 (block dim equal to the full array dim is exempt
    # from the 128-lane rule; padding tiny K just streams zeros).
    Kp = K if K <= 128 else _round_up(K, 128)
    # E: lane-dense output; 256-aligned when E >= 256 (256x256 MXU on v6e/v7x).
    Ep = _round_up(E, 256) if E >= 256 else _round_up(E, 128)

    # M: balanced tiles, >= 2 grid steps when possible (v7x has 2 TensorCores),
    # sublane multiple matched to the compute dtype's packing.
    itemsize = jnp.dtype(compute_dtype).itemsize
    sublane = max(8, 32 // max(itemsize, 1))          # 8 f32, 16 bf16, 32 int8
    num_tiles = max(pl.cdiv(M, tile_m), 2 if M >= 2 * sublane else 1)
    tm = _round_up(pl.cdiv(M, num_tiles), sublane)
    Mp = _round_up(M, tm)
    grid_m = Mp // tm

    # --- patch extraction (fused into the pallas_call via allow_input_fusion) --
    # Row-major over (Hp, Wp) matches torch's flatten(2).transpose(1, 2).
    patches = (
        x.reshape(B, C, Hp, p, Wp, p)
         .transpose(0, 2, 4, 1, 3, 5)                 # (B, Hp, Wp, C, p, p)
         .reshape(M, K)
         .astype(compute_dtype)
    )
    if Mp != M or Kp != K:
        patches = jnp.pad(patches, ((0, Mp - M), (0, Kp - K)))

    w2 = weight.reshape(E, K).T.astype(compute_dtype)             # (K, E)
    if Kp != K or Ep != E:
        w2 = jnp.pad(w2, ((0, Kp - K), (0, Ep - E)))              # (Kp, Ep)
    b2 = bias.astype(jnp.float32).reshape(1, E)
    if Ep != E:
        b2 = jnp.pad(b2, ((0, 0), (0, Ep - E)))                   # (1, Ep) f32

    out = pl.pallas_call(
        patch_embed_kernel,
        out_shape=jax.ShapeDtypeStruct((Mp, Ep), out_dtype),
        grid_spec=pl.GridSpec(
            grid=(grid_m,),
            in_specs=[
                pl.BlockSpec((tm, Kp), lambda i: (i, 0)),   # streamed x tiles
                pl.BlockSpec((Kp, Ep), lambda i: (0, 0)),   # weight: constant block (resident)
                pl.BlockSpec((1, Ep), lambda i: (0, 0)),    # bias: constant block
            ],
            out_specs=pl.BlockSpec((tm, Ep), lambda i: (i, 0)),
        ),
        compiler_params=pltpu.CompilerParams(
            dimension_semantics=("parallel",),
            vmem_limit_bytes=_vmem_limit_bytes(),
            allow_input_fusion=[True, False, False],
        ),
    )(patches, w2, b2)

    # Strip padding, restore (B, N, E).
    return out[:M, :E].reshape(B, N, E)


if __name__ == "__main__":
    # Small shapes consistent with the module: img_size=16, patch_size=4,
    # in_chans=1 (module default), embed_dim=32 -> num_patches = 16.
    B, C, H, W = 2, 1, 16, 16
    p = 4
    E = 32

    key = jax.random.PRNGKey(0)
    kx, kw, kb = jax.random.split(key, 3)
    x = jax.random.normal(kx, (B, C, H, W), dtype=jnp.float32)
    # Deterministic synthetic Conv2d(in_chans=1, E, kernel=p, stride=p) params.
    weight = jax.random.normal(kw, (E, C, p, p), dtype=jnp.float32) * 0.02
    bias = jax.random.normal(kb, (E,), dtype=jnp.float32) * 0.01

    # Reference in plain JAX (same patch-matmul formulation, f32 throughout).
    Hp, Wp = H // p, W // p
    patches_ref = (
        x.reshape(B, C, Hp, p, Wp, p)
         .transpose(0, 2, 4, 1, 3, 5)
         .reshape(B, Hp * Wp, C * p * p)
    )
    ref = jnp.einsum("bnk,ek->bne", patches_ref, weight.reshape(E, -1)) + bias

    # f32 operand path: strict numeric check.
    out_f32 = jax.block_until_ready(
        dev_token_learner(x, weight, bias, p, compute_dtype=jnp.float32))
    assert out_f32.shape == (B, Hp * Wp, E)
    assert jnp.allclose(out_f32, ref, atol=1e-4, rtol=1e-4)

    # Default fast path (bf16 streamed operands, f32 accumulation): looser check.
    out_bf16 = jax.block_until_ready(dev_token_learner(x, weight, bias, p))
    assert out_bf16.shape == (B, Hp * Wp, E)
    assert jnp.allclose(out_bf16, ref, atol=3e-2, rtol=3e-2)

    print("KERNEL_OK")
</pallas_src>

<mosaic_0001>
module attributes {stable_mosaic.version = 11 : i64} {
  func.func @patch_embed_kernel(%arg0: i32, %arg1: memref<16x16xf32, #tpu.memory_space<vmem>>, %arg2: memref<16x128xf32, #tpu.memory_space<vmem>>, %arg3: memref<1x128xf32, #tpu.memory_space<vmem>>, %arg4: memref<16x128xf32, #tpu.memory_space<vmem>>) attributes {dimension_semantics = [#tpu.dimension_semantics<parallel>], iteration_bounds = array<i64: 2>, scalar_prefetch = 0 : i64, scratch_operands = 0 : i64, tpu.core_type = #tpu.core_type<tc>, window_params = [{transform_indices = @transform_0, window_bounds = array<i64: 16, 16>}, {pipeline_mode = #tpu.pipeline_mode<synchronous>, transform_indices = @transform_1, window_bounds = array<i64: 16, 128>}, {pipeline_mode = #tpu.pipeline_mode<synchronous>, transform_indices = @transform_2, window_bounds = array<i64: 1, 128>}, {transform_indices = @transform_3, window_bounds = array<i64: 16, 128>}]} {
    %c0 = arith.constant 0 : index
    %c0_0 = arith.constant 0 : index
    %0 = vector.load %arg1[%c0, %c0_0] : memref<16x16xf32, #tpu.memory_space<vmem>>, vector<16x16xf32>
    %c0_1 = arith.constant 0 : index
    %c0_2 = arith.constant 0 : index
    %1 = vector.load %arg2[%c0_1, %c0_2] : memref<16x128xf32, #tpu.memory_space<vmem>>, vector<16x128xf32>
    %cst = arith.constant dense<0.000000e+00> : vector<16x128xf32>
    %2 = tpu.matmul %0, %1, %cst {dimension_numbers = #tpu.dot_dimension_numbers<[1], [0], [0], [1], [0, 0, 1, 1], [], []>} : vector<16x16xf32>, vector<16x128xf32>, vector<16x128xf32> -> vector<16x128xf32>
    %c0_3 = arith.constant 0 : index
    %c0_4 = arith.constant 0 : index
    %3 = vector.load %arg3[%c0_3, %c0_4] : memref<1x128xf32, #tpu.memory_space<vmem>>, vector<1x128xf32>
    %4 = vector.broadcast %3 : vector<1x128xf32> to vector<16x128xf32>
    %5 = arith.addf %2, %4 : vector<16x128xf32>
    %c0_5 = arith.constant 0 : index
    %c0_6 = arith.constant 0 : index
    %6 = vector.load %arg4[%c0_5, %c0_6] : memref<16x128xf32, #tpu.memory_space<vmem>>, vector<16x128xf32>
    tpu.vector_store %arg4[%c0_5, %c0_6], %5 {strides = array<i32>} : memref<16x128xf32, #tpu.memory_space<vmem>>, vector<16x128xf32>,
    return
  }
  func.func @transform_0(%arg0: i32) -> (i32, i32) {
    %c0_i32 = arith.constant 0 : i32
    %c0_i32_0 = arith.constant 0 : i32
    return %arg0, %c0_i32 : i32, i32
  }
  func.func @transform_1(%arg0: i32) -> (i32, i32) {
    %c0_i32 = arith.constant 0 : i32
    %c0_i32_0 = arith.constant 0 : i32
    %c0_i32_1 = arith.constant 0 : i32
    return %c0_i32, %c0_i32_0 : i32, i32
  }
  func.func @transform_2(%arg0: i32) -> (i32, i32) {
    %c0_i32 = arith.constant 0 : i32
    %c0_i32_0 = arith.constant 0 : i32
    %c0_i32_1 = arith.constant 0 : i32
    return %c0_i32, %c0_i32_0 : i32, i32
  }
  func.func @transform_3(%arg0: i32) -> (i32, i32) {
    %c0_i32 = arith.constant 0 : i32
    %c0_i32_0 = arith.constant 0 : i32
    return %arg0, %c0_i32 : i32, i32
  }
}

</mosaic_0001>

<llo_original>
// kernel: tpu_custom_call.1
$region0: #{tpu_custom_call.1}
  #allocation0 [shape = 'u32[]', space=smem, size = 0x4, offset = 0x4, fixed_abs, tag = 'smem constant byte address 0x4 - core index']
  #allocation1 [shape = 'u32[144,128]{1,0:T(1,128)}', space=vmem, size = 0x12000, scoped, tag = 'internal scratch']
  %s0 = inlined_call_operand.vmem [shape: f32[32,16], index: 0, kind: input, shape index: {}]
  %s1 = inlined_call_operand.vmem [shape: f32[16,128], index: 1, kind: input, shape index: {}]
  %s2 = inlined_call_operand.vmem [shape: f32[1,128], index: 2, kind: input, shape index: {}]
  %s3 = inlined_call_operand.hbm [shape: f32[32,128], index: 3, kind: output, shape index: {}]
  %s4 = sld [smem:[#allocation0]]
  $region45: #{tpu_custom_call.1} parent=0
    _
  %s6 = ssub.s32 1, %s4
  %s7 = scalar_select 0, %s6, %s4
  $region1: #{tpu_custom_call.1} parent=0
    #allocation2 [shape = 'u8[16384]{0}', space=vmem, size = 0x4000, scoped, tag = 'output window, operand 0']
    #allocation3 [shape = 's32[2]{0}', space=sflag, size = 0x8, scoped, tag = 'scoped memory for tpu_custom_call.1']
    %8 = vsyncpa [#allocation3], 0
    %s9 = scalar_lea.sflag [#allocation3], 1
    %10 = vsyncpa %s9, 0
    loop: start=0, step=1, limit=4
    $region2: #{tpu_custom_call.1} parent=1 // loop_pre_header
      _
    $region3: #{tpu_custom_call.1} parent=1 // loop_header
      %s12 = sphi 0, %s16
      %p13 = scmp.ge.s32.totalorder %s12, 4
      %s22 = sphi 0, %s24
      %s25 = sphi 0, %s22
      %s26 = sphi 0, %s25
      %s42 = sphi 0, %s26
      %s46 = sphi 0, %s46
      %s48 = sphi 0, %s46
      %s49 = sphi 0, %s48
      %s63 = sphi 0, %s49
      %s67 = sphi 0, %s67
      %s69 = sphi 0, %s67
      %s70 = sphi 0, %s69
      %s84 = sphi 0, %s70
      %s90 = sphi 0, %s92
      %s93 = sphi 0, %s90
      %s94 = sphi 0, %s93
      %s110 = sphi 0, %s94
    $region4: #{tpu_custom_call.1} parent=1 // loop_header_branch
      %15 = sbr.rel (%p13) target = $region8
    $region5: #{tpu_custom_call.1} parent=1 // loop_body
      %s17 = ssub.s32 %s12, 1
      %s18 = ssub.s32 %s12, 2
      %s19 = sadd.s32 %s12, 1
      %s20 = ssub.s32 %s12, %s19
      %p21 = scmp.eq.s32.totalorder %s20, 0
      %s23 = sadd.s32 %s22, 1
      %s24 = scalar_select %p21, %s22, %s23
      %p27 = pneg %p21
      %p28 = scmp.eq.s32.totalorder %s12, 1
      %p29 = por %p27, %p28
      %p30 = scmp.ne.s32.totalorder %s22, %s25
      %p31 = scmp.eq.s32.totalorder %s12, 0
      %p32 = por %p30, %p31
      %p33 = scmp.ne.s32.totalorder %s22, %s25
      %p34 = scmp.eq.s32.totalorder %s17, 1
      %p35 = por %p33, %p34
      %p36 = scmp.ne.s32.totalorder %s25, %s26
      %p37 = scmp.eq.s32.totalorder %s17, 0
      %p38 = por %p36, %p37
      %p39 = scmp.ne.s32.totalorder %s25, %s26
      %p40 = scmp.eq.s32.totalorder %s18, 1
      %p41 = por %p39, %p40
      %p43 = scmp.ne.s32.totalorder %s26, %s42
      %p44 = scmp.eq.s32.totalorder %s18, 0
      %p45 = por %p43, %p44
      %s47 = sadd.s32 %s46, 1
      %p50 = scmp.eq.s32.totalorder %s12, 1
      %p51 = scmp.ne.s32.totalorder %s46, %s48
      %p52 = scmp.eq.s32.totalorder %s12, 0
      %p53 = por %p51, %p52
      %p54 = scmp.ne.s32.totalorder %s46, %s48
      %p55 = scmp.eq.s32.totalorder %s17, 1
      %p56 = por %p54, %p55
      %p57 = scmp.ne.s32.totalorder %s48, %s49
      %p58 = scmp.eq.s32.totalorder %s17, 0
      %p59 = por %p57, %p58
      %p60 = scmp.ne.s32.totalorder %s48, %s49
      %p61 = scmp.eq.s32.totalorder %s18, 1
      %p62 = por %p60, %p61
      %p64 = scmp.ne.s32.totalorder %s49, %s63
      %p65 = scmp.eq.s32.totalorder %s18, 0
      %p66 = por %p64, %p65
      %s68 = sadd.s32 %s67, 1
      %p71 = scmp.eq.s32.totalorder %s12, 1
      %p72 = scmp.ne.s32.totalorder %s67, %s69
      %p73 = scmp.eq.s32.totalorder %s12, 0
      %p74 = por %p72, %p73
      %p75 = scmp.ne.s32.totalorder %s67, %s69
      %p76 = scmp.eq.s32.totalorder %s17, 1
      %p77 = por %p75, %p76
      %p78 = scmp.ne.s32.totalorder %s69, %s70
      %p79 = scmp.eq.s32.totalorder %s17, 0
      %p80 = por %p78, %p79
      %p81 = scmp.ne.s32.totalorder %s69, %s70
      %p82 = scmp.eq.s32.totalorder %s18, 1
      %p83 = por %p81, %p82
      %p85 = scmp.ne.s32.totalorder %s70, %s84
      %p86 = scmp.eq.s32.totalorder %s18, 0
      %p87 = por %p85, %p86
      %s88 = ssub.s32 %s12, %s19
      %p89 = scmp.eq.s32.totalorder %s88, 0
      %s91 = sadd.s32 %s90, 1
      %s92 = scalar_select %p89, %s90, %s91
      %p95 = pneg %p89
      %p96 = scmp.eq.s32.totalorder %s12, 1
      %p97 = por %p95, %p96
      %p98 = scmp.ne.s32.totalorder %s90, %s93
      %p99 = scmp.eq.s32.totalorder %s12, 0
      %p100 = por %p98, %p99
      %p101 = scmp.ne.s32.totalorder %s90, %s93
      %p102 = scmp.eq.s32.totalorder %s17, 1
      %p103 = por %p101, %p102
      %p104 = scmp.ne.s32.totalorder %s93, %s94
      %p105 = scmp.eq.s32.totalorder %s17, 0
      %p106 = por %p104, %p105
      %p107 = scmp.ne.s32.totalorder %s93, %s94
      %p108 = scmp.eq.s32.totalorder %s18, 1
      %p109 = por %p107, %p108
      %p111 = scmp.ne.s32.totalorder %s94, %s110
      %p112 = scmp.eq.s32.totalorder %s18, 0
      %p113 = por %p111, %p112
      %p114 = scmp.le.s32.totalorder 1, %s12
      %p115 = scmp.lt.s32.totalorder %s12, 3
      %p116 = pnand %p114, %p115
      %p117 = pneg %p116
      // Predicated region
      $region9: #{tpu_custom_call.1} parent=5 // pred_check
        _
      $region10: #{tpu_custom_call.1} parent=5 // pred_check_branch
        %119 = sbr.rel (%p116) target = $region12
      $region11: #{tpu_custom_call.1} parent=5 // pred_region
        %s120 = ssub.s32 %s12, 1
        // Predicated region
        $region13: #{tpu_custom_call.1} parent=11 // pred_check
          %p121 = pneg %p59
        $region14: #{tpu_custom_call.1} parent=11 // pred_check_branch
          %123 = sbr.rel (%p121) target = $region16
        $region15: #{tpu_custom_call.1} parent=11 // pred_region
          _
        $region16: #{tpu_custom_call.1} parent=11 // pred_fallthru
          _
        // Predicated region
        $region17: #{tpu_custom_call.1} parent=11 // pred_check
          %p124 = pneg %p80
        $region18: #{tpu_custom_call.1} parent=11 // pred_check_branch
          %126 = sbr.rel (%p124) target = $region20
        $region19: #{tpu_custom_call.1} parent=11 // pred_region
          _
        $region20: #{tpu_custom_call.1} parent=11 // pred_fallthru
          _
      $region12: #{tpu_custom_call.1} parent=5 // pred_fallthru
        _
      %p127 = scmp.lt.s32.totalorder %s12, 2
      // Predicated region
      $region21: #{tpu_custom_call.1} parent=5 // pred_check
        %p128 = pneg %p127
      $region22: #{tpu_custom_call.1} parent=5 // pred_check_branch
        %130 = sbr.rel (%p128) target = $region24
      $region23: #{tpu_custom_call.1} parent=5 // pred_region
        // Predicated region
        $region25: #{tpu_custom_call.1} parent=23 // pred_check
          %p131 = pneg %p32
        $region26: #{tpu_custom_call.1} parent=23 // pred_check_branch
          %133 = sbr.rel (%p131) target = $region28
        $region27: #{tpu_custom_call.1} parent=23 // pred_region
          %s134 = smul.u32 2, %s12
          %p135 = scmp.lt.s32.totalorder %s134, 3
          %s136 = scalar_select %p135, %s134, 3
          %s137 = smul.addr %s136, 8
          %s138 = scalar_lea.vmem %s0, %s137
          %s139 = smul.u32 2, %s12
        $region28: #{tpu_custom_call.1} parent=23 // pred_fallthru
          _
      $region24: #{tpu_custom_call.1} parent=5 // pred_fallthru
        _
      %p140 = scmp.le.s32.totalorder 1, %s12
      %p141 = scmp.lt.s32.totalorder %s12, 3
      %p142 = pnand %p140, %p141
      %p143 = pneg %p142
      // Predicated region
      $region29: #{tpu_custom_call.1} parent=5 // pred_check
        _
      $region30: #{tpu_custom_call.1} parent=5 // pred_check_branch
        %145 = sbr.rel (%p142) target = $region32
      $region31: #{tpu_custom_call.1} parent=5 // pred_region
        %s146 = ssub.s32 %s12, 1
        %s147 = smul.u32 2, %s17
        %p148 = scmp.lt.s32.totalorder %s147, 3
        %s149 = scalar_select %p148, %s147, 3
        %s150 = smul.addr %s149, 8
        %s151 = scalar_lea.vmem %s0, %s150
        %p152 = pneg %p38
        %p153 = pneg %p35
        %p154 = pneg %p59
        %p155 = pneg %p56
        %p156 = pneg %p80
        %p157 = pneg %p77
        %p158 = pneg %p106
        %p159 = pneg %p103
        %s160 = sand.u32 %s93, 1
        %s161 = scalar_lea.sflag [#allocation3], %s160
        %s162 = sand.u32 %s93, 1
        %s163 = smul.addr %s162, 16
        %s164 = scalar_lea.vmem [#allocation2], %s163
        %s165 = smul.u32 2, %s17
        %p166 = scmp.lt.s32.totalorder %s165, 3
        %s167 = scalar_select %p166, %s165, 3
        %s168 = smul.addr %s167, 8
        %s169 = scalar_lea.vmem %s0, %s168
        %s170 = smul.u32 2, %s17
        %s171 = smul.u32 2, %s17
        %v172 = vld [vmem:[%s169] sm:$0xff]
        %v173 = vld [vmem:[%s169 + $0x8] sm:$0xff]
        %v174 = vld [vmem:[%s1] sm:$0xff]
        %v175 = vld [vmem:[%s1 + $0x8] sm:$0xff]
        %v176 = vld [vmem:[%s2] sm:$0x1]
        %v178 = vlaneseq
        %v179 = vshrl.u32 %v178, 7
        %v180 = vsub.s32 0, %v179
        %v181 = vrot.slane %v176, %v180
        %vm183 = vcmask 130048
        %v185 = vsel %vm183, %v172, 0
        %v188 = vsel %vm183, %v173, 0
        %190 = vmatprep.subr.mxu0 0.0
        %191 = vmatpush1.msra.mxu0 %v174
        %192 = vmatprep.subr.mxu0 0.0
        %193 = vmatpush1.msra.mxu0 %v175
        %194 = vmatprep.subr.mxu0 0.0
        %195 = vmatpush1.msra.mxu0 0.0
        %196 = vmatprep.subr.mxu0 0.0
        %197 = vmatpush1.msra.mxu0 0.0
        %198 = vmatprep.subr.mxu0 0.0
        %199 = vmatpush1.msra.mxu0 0.0
        %200 = vmatprep.subr.mxu0 0.0
        %201 = vmatpush1.msra.mxu0 0.0
        %202 = vmatprep.subr.mxu0 0.0
        %203 = vmatpush1.msra.mxu0 0.0
        %204 = vmatprep.subr.mxu0 0.0
        %205 = vmatpush1.msra.mxu0 0.0
        %206 = vmatprep.subr.mxu0 0.0
        %207 = vmatpush1.msra.mxu0 0.0
        %208 = vmatprep.subr.mxu0 0.0
        %209 = vmatpush1.msra.mxu0 0.0
        %210 = vmatprep.subr.mxu0 0.0
        %211 = vmatpush1.msra.mxu0 0.0
        %212 = vmatprep.subr.mxu0 0.0
        %213 = vmatpush1.msra.mxu0 0.0
        %214 = vmatprep.subr.mxu0 0.0
        %215 = vmatpush1.msra.mxu0 0.0
        %216 = vmatprep.subr.mxu0 0.0
        %217 = vmatpush1.msra.mxu0 0.0
        %218 = vmatprep.subr.mxu0 0.0
        %219 = vmatpush1.msra.mxu0 0.0
        %220 = vmatprep.subr.mxu0 0.0
        %221 = vmatpush1.msra.mxu0 0.0
        %222 = vmatprep.subr.mxu0 0.0
        %223 = vmatpush1.msra.mxu0 0.0
        %224 = vmatprep.subr.mxu0 0.0
        %225 = vmatpush1.msra.mxu0 0.0
        %226 = vmatprep.subr.mxu0 0.0
        %227 = vmatpush1.msra.mxu0 0.0
        %228 = vmatprep.subr.mxu0 0.0
        %229 = vmatpush1.msra.mxu0 0.0
        %230 = vmatprep.subr.mxu0 0.0
        %231 = vmatpush1.msra.mxu0 0.0
        %232 = vmatprep.subr.mxu0 0.0
        %233 = vmatpush1.msra.mxu0 0.0
        %234 = vmatprep.subr.mxu0 0.0
        %235 = vmatpush1.msra.mxu0 0.0
        %236 = vmatprep.subr.mxu0 0.0
        %237 = vmatpush1.msra.mxu0 0.0
        %238 = vmatprep.subr.mxu0 0.0
        %239 = vmatpush1.msra.mxu0 0.0
        %240 = vmatprep.subr.mxu0 0.0
        %241 = vmatpush1.msra.mxu0 0.0
        %242 = vmatprep.subr.mxu0 0.0
        %243 = vmatpush1.msra.mxu0 0.0
        %244 = vmatprep.subr.mxu0 0.0
        %245 = vmatpush1.msra.mxu0 0.0
        %246 = vmatprep.subr.mxu0 0.0
        %247 = vmatpush1.msra.mxu0 0.0
        %248 = vmatprep.subr.mxu0 0.0
        %249 = vmatpush1.msra.mxu0 0.0
        %250 = vmatprep.subr.mxu0 0.0
        %251 = vmatpush1.msra.mxu0 0.0
        %252 = vmatprep.subr.mxu0 0.0
        %253 = vmatpush1.msra.mxu0 0.0
        %254 = vmatprep.mubr.f32.mxu0 0.0
        %255 = vmatmul.mubr.f32.gmra.mrb[0].mxu0 %v185
        %v256 = vpop.f32.mrb[0].mxu0
        %v257 = vadd.f32 %v181, %v256
        %v258 = vpop.f32.mrb[0].mxu0
        %259 = vmatprep.mubr.f32.mxu0 0.0
        %260 = vmatmul.mubr.f32.gmra.mrb[0].mxu0 %v188
        %v261 = vpop.f32.mrb[0].mxu0
        %v262 = vadd.f32 %v181, %v261
        %v263 = vpop.f32.mrb[0].mxu0
        %264 = vdwg.mxu0
        %265 = vst [vmem:[%s164] sm:$0xff] %v257
        %266 = vst [vmem:[%s164 + $0x8] sm:$0xff] %v262
        %s267 = sand.u32 %s93, 1
        %s268 = scalar_lea.sflag [#allocation3], %s267
        %s269 = sand.u32 %s93, 1
        %s270 = smul.addr %s269, 16
        %s271 = scalar_lea.vmem [#allocation2], %s270
        // Predicated region
        $region33: #{tpu_custom_call.1} parent=31 // pred_check
          %p272 = pneg %p103
        $region34: #{tpu_custom_call.1} parent=31 // pred_check_branch
          %274 = sbr.rel (%p272) target = $region36
        $region35: #{tpu_custom_call.1} parent=31 // pred_region
          %s275 = smul.u32 2, %s17
          %s277 = ssub.s32 256, 256
          %278 = vsyncadd %s268, %s277
          %s279 = smul.addr %s275, 128
          %s280 = scalar_lea.hbm %s3, %s279
          %s281 = sshll.u32 %s271, 4
          %s282 = int_to_ptr.vmem [resolvable:$true] %s281
          %287 = dma.vmem_to_hbm [thread:$0]  %s282, 256, %s280, %s268, 128, 128, 8
        $region36: #{tpu_custom_call.1} parent=31 // pred_fallthru
          _
      $region32: #{tpu_custom_call.1} parent=5 // pred_fallthru
        _
      %p288 = scmp.le.s32.totalorder 2, %s12
      // Predicated region
      $region37: #{tpu_custom_call.1} parent=5 // pred_check
        %p289 = pneg %p288
      $region38: #{tpu_custom_call.1} parent=5 // pred_check_branch
        %291 = sbr.rel (%p289) target = $region40
      $region39: #{tpu_custom_call.1} parent=5 // pred_region
        %s292 = ssub.s32 %s12, 2
        // Predicated region
        $region41: #{tpu_custom_call.1} parent=39 // pred_check
          %p293 = pneg %p109
        $region42: #{tpu_custom_call.1} parent=39 // pred_check_branch
          %295 = sbr.rel (%p293) target = $region44
        $region43: #{tpu_custom_call.1} parent=39 // pred_region
          %s296 = sand.u32 %s94, 1
          %s297 = scalar_lea.sflag [#allocation3], %s296
          %s298 = sand.u32 %s94, 1
          %s299 = smul.addr %s298, 16
          %s300 = scalar_lea.vmem [#allocation2], %s299
          %301 = dma.done %s297, 256
        $region44: #{tpu_custom_call.1} parent=39 // pred_fallthru
          _
      $region40: #{tpu_custom_call.1} parent=5 // pred_fallthru
        _
    $region6: #{tpu_custom_call.1} parent=1 // loop_footer
      %s16 = sadd.s32 1, %s12
    $region7: #{tpu_custom_call.1} parent=1 // loop_footer_branch
      %11 = sbr.rel target = $region3
    $region8: #{tpu_custom_call.1} parent=1 // loop_exit
      _
    %302 = vsyncpa [#allocation3], 1
    %s303 = scalar_lea.sflag [#allocation3], 1
    %304 = vsyncpa %s303, 1

</llo_original>
